<compile_context>
chip_gen: v7x
topology: tpu7x:2x2x1
jax: 0.10.0
libtpu: 0.0.40
codegen_flags: <defaults>
</compile_context>

<pallas_src>
import jax
import jax.numpy as jnp
import numpy as np
from jax.experimental import pallas as pl
from jax.experimental.pallas import tpu as pltpu


def clip_align_kernel(v_ref, w_ref, t_ref, o_ref):
    """One (N-tile, M-tile) block of the CLIPAlign forward.

    v_ref : (tm, V)  bf16  -- visual embeddings tile
    w_ref : (V, L)   bf16  -- projection weight, pre-transposed (VMEM-resident)
    t_ref : (L, tn)  bf16  -- pre-normalized, pre-scaled text matrix, transposed
    o_ref : (tm, tn) out_dtype -- logits tile (lane-dense store)
    """
    # Projection (MXU matmul, f32 accumulation).
    img = jnp.dot(v_ref[...], w_ref[...], preferred_element_type=jnp.float32)

    # L2-normalize image features: rsqrt (EUP) + multiply (VPU), all f32.
    # The tiny floor only guards garbage/zero rows in masked edge blocks.
    sumsq = jnp.sum(img * img, axis=-1, keepdims=True)
    inv = jax.lax.rsqrt(jnp.maximum(sumsq, 1e-24))
    img_n = (img * inv).astype(t_ref.dtype)

    # Scaled cosine-similarity logits; cast only at the store (output bytes
    # are the binding resource).
    o_ref[...] = jnp.dot(img_n, t_ref[...],
                         preferred_element_type=jnp.float32).astype(o_ref.dtype)


def precompute_clip_align_constants(w_proj, text_embed, logit_scale,
                                    dtype=jnp.bfloat16):
    """Call-invariant preprocessing (freeze=True -> compute once, reuse).

    Returns:
      w_t      : (V, L)  projection weight transposed for (M,V)@(V,L)
      t_scaled : (L, N)  exp(logit_scale) * L2-normalized text, transposed
    """
    t = text_embed.astype(jnp.float32)
    t_n = t / jnp.linalg.norm(t, axis=-1, keepdims=True)
    scale = jnp.exp(logit_scale.astype(jnp.float32))
    t_scaled = (scale * t_n).T.astype(dtype)          # (L, N)
    w_t = w_proj.T.astype(dtype)                      # (V, L)
    return w_t, t_scaled


def clip_align_forward(visual_embed, w_t, t_scaled, *,
                       tm=256, tn=None, out_dtype=jnp.bfloat16,
                       vmem_block_budget=30 << 20, vmem_limit_bytes=48 << 20):
    """visual_embed: (B, Q, v_dim); w_t: (v_dim, l_dim); t_scaled: (l_dim, N).
    Returns logits (B, Q, N) in `out_dtype` (bf16 by default)."""
    B, Q, V = visual_embed.shape
    L, N = t_scaled.shape
    assert w_t.shape == (V, L)
    M = B * Q

    in_dtype = t_scaled.dtype
    in_bytes = np.dtype(in_dtype).itemsize
    out_bytes = np.dtype(out_dtype).itemsize

    x = visual_embed.reshape(M, V).astype(in_dtype)   # (M, V)

    # ---- M tile: whole-M if small, else a multiple of 16 (bf16 sublanes). ----
    if M <= tm:
        tm = M                                        # equals full dim -> legal
    else:
        tm = max(16, (tm // 16) * 16)

    # ---- N tile: prefer whole-N so t is VMEM-resident (loaded once); only
    # shrink to a multiple of 128 if the double-buffered block set would blow
    # the VMEM budget (sized for v7x's 64 MiB / v5e's 16 MiB scoped default). ----
    fixed = 2 * tm * V * in_bytes + 2 * V * L * in_bytes
    per_tn = 2 * L * in_bytes + 2 * tm * out_bytes
    if tn is None:
        tn = N
        if fixed + per_tn * tn > vmem_block_budget:
            tn = max(128, ((vmem_block_budget - fixed) // per_tn) // 128 * 128)
            tn = min(tn, N)

    # N on the OUTER axis, M inner: the t block index is constant over the
    # inner loop, so it is never re-streamed per M tile.
    grid = (pl.cdiv(N, tn), pl.cdiv(M, tm))

    out = pl.pallas_call(
        clip_align_kernel,
        out_shape=jax.ShapeDtypeStruct((M, N), out_dtype),   # no padding: edge blocks masked
        grid=grid,
        in_specs=[
            pl.BlockSpec((tm, V), lambda n, m: (m, 0)),      # visual tile
            pl.BlockSpec((V, L), lambda n, m: (0, 0)),       # weight (resident)
            pl.BlockSpec((L, tn), lambda n, m: (0, n)),      # scaled/normalized text
        ],
        out_specs=pl.BlockSpec((tm, tn), lambda n, m: (m, n)),
        compiler_params=pltpu.CompilerParams(
            dimension_semantics=("parallel", "parallel"),
            vmem_limit_bytes=vmem_limit_bytes),
    )(x, w_t, t_scaled)

    return out.reshape(B, Q, N)


def reference_forward(visual_embed, w_proj, text_embed, logit_scale):
    img = jnp.einsum("bqv,lv->bql", visual_embed, w_proj)
    img = img / jnp.linalg.norm(img, axis=-1, keepdims=True)
    txt = text_embed / jnp.linalg.norm(text_embed, axis=-1, keepdims=True)
    return jnp.exp(logit_scale) * jnp.einsum("bql,nl->bqn", img, txt)


if __name__ == "__main__":
    # Small shapes consistent with the module:
    #   v_dim (DINO hidden)   = 32
    #   l_dim (CLIP text dim) = 64
    #   num text prototypes   = 256
    B, Q, V, L, N = 2, 8, 32, 64, 256

    key = jax.random.PRNGKey(0)
    k_vis, k_w, k_txt = jax.random.split(key, 3)

    visual_embed = jax.random.normal(k_vis, (B, Q, V), dtype=jnp.float32)

    # dino_visual_proj: nn.Linear(v_dim, l_dim, bias=False), init normal std=l_dim**-0.5
    w_proj = jax.random.normal(k_w, (L, V), dtype=jnp.float32) * (L ** -0.5)

    # Offline text prototypes (synthetic, deterministic).
    text_embed = jax.random.normal(k_txt, (N, L), dtype=jnp.float32)

    # CLIP logit_scale init: ln(1 / 0.07), frozen.
    logit_scale = jnp.float32(np.log(1.0 / 0.07))

    # freeze=True -> text / projection constants are precomputed once.
    w_t, t_scaled = precompute_clip_align_constants(w_proj, text_embed, logit_scale)

    logits = clip_align_forward(visual_embed, w_t, t_scaled)
    logits = jax.block_until_ready(logits)

    ref = reference_forward(visual_embed, w_proj, text_embed, logit_scale)
    assert logits.shape == (B, Q, N)
    # bf16 MXU operands + bf16 output store -> looser tolerance than pure f32.
    np.testing.assert_allclose(np.asarray(logits, dtype=np.float32),
                               np.asarray(ref), rtol=3e-2, atol=2e-1)

    print("KERNEL_OK")
</pallas_src>

<mosaic_0001>
module attributes {stable_mosaic.version = 11 : i64} {
  func.func @clip_align_kernel(%arg0: i32, %arg1: i32, %arg2: memref<16x32xbf16, #tpu.memory_space<vmem>>, %arg3: memref<32x64xbf16, #tpu.memory_space<vmem>>, %arg4: memref<64x256xbf16, #tpu.memory_space<vmem>>, %arg5: memref<16x256xbf16, #tpu.memory_space<vmem>>) attributes {dimension_semantics = [#tpu.dimension_semantics<parallel>, #tpu.dimension_semantics<parallel>], iteration_bounds = array<i64: 1, 1>, scalar_prefetch = 0 : i64, scratch_operands = 0 : i64, tpu.core_type = #tpu.core_type<tc>, window_params = [{transform_indices = @transform_0, window_bounds = array<i64: 16, 32>}, {pipeline_mode = #tpu.pipeline_mode<synchronous>, transform_indices = @transform_1, window_bounds = array<i64: 32, 64>}, {transform_indices = @transform_2, window_bounds = array<i64: 64, 256>}, {transform_indices = @transform_3, window_bounds = array<i64: 16, 256>}]} {
    %c0 = arith.constant 0 : index
    %c0_0 = arith.constant 0 : index
    %0 = vector.load %arg2[%c0, %c0_0] : memref<16x32xbf16, #tpu.memory_space<vmem>>, vector<16x32xbf16>
    %c0_1 = arith.constant 0 : index
    %c0_2 = arith.constant 0 : index
    %1 = vector.load %arg3[%c0_1, %c0_2] : memref<32x64xbf16, #tpu.memory_space<vmem>>, vector<32x64xbf16>
    %cst = arith.constant dense<0.000000e+00> : vector<16x64xf32>
    %2 = tpu.matmul %0, %1, %cst {dimension_numbers = #tpu.dot_dimension_numbers<[1], [0], [0], [1], [0, 0, 1, 1], [], []>} : vector<16x32xbf16>, vector<32x64xbf16>, vector<16x64xf32> -> vector<16x64xf32>
    %3 = arith.mulf %2, %2 : vector<16x64xf32>
    %cst_3 = arith.constant dense<0.000000e+00> : vector<16xf32>
    %4 = vector.multi_reduction <add>, %3, %cst_3 [1] : vector<16x64xf32> to vector<16xf32>
    %5 = vector.shape_cast %4 : vector<16xf32> to vector<16x1xf32>
    %cst_4 = arith.constant 1.000000e-24 : f32
    %6 = vector.broadcast %cst_4 : f32 to vector<16x1xf32>
    %7 = arith.maximumf %5, %6 : vector<16x1xf32>
    %8 = math.rsqrt %7 : vector<16x1xf32>
    %9 = vector.broadcast %8 : vector<16x1xf32> to vector<16x64xf32>
    %10 = arith.mulf %2, %9 : vector<16x64xf32>
    %11 = arith.truncf %10 : vector<16x64xf32> to vector<16x64xbf16>
    %c0_5 = arith.constant 0 : index
    %c0_6 = arith.constant 0 : index
    %12 = vector.load %arg4[%c0_5, %c0_6] : memref<64x256xbf16, #tpu.memory_space<vmem>>, vector<64x256xbf16>
    %cst_7 = arith.constant dense<0.000000e+00> : vector<16x256xf32>
    %13 = tpu.matmul %11, %12, %cst_7 {dimension_numbers = #tpu.dot_dimension_numbers<[1], [0], [0], [1], [0, 0, 1, 1], [], []>} : vector<16x64xbf16>, vector<64x256xbf16>, vector<16x256xf32> -> vector<16x256xf32>
    %14 = arith.truncf %13 : vector<16x256xf32> to vector<16x256xbf16>
    %c0_8 = arith.constant 0 : index
    %c0_9 = arith.constant 0 : index
    %15 = vector.load %arg5[%c0_8, %c0_9] : memref<16x256xbf16, #tpu.memory_space<vmem>>, vector<16x256xbf16>
    tpu.vector_store %arg5[%c0_8, %c0_9], %14 {strides = array<i32>} : memref<16x256xbf16, #tpu.memory_space<vmem>>, vector<16x256xbf16>,
    return
  }
  func.func @transform_0(%arg0: i32, %arg1: i32) -> (i32, i32) {
    %c0_i32 = arith.constant 0 : i32
    %c0_i32_0 = arith.constant 0 : i32
    return %arg1, %c0_i32 : i32, i32
  }
  func.func @transform_1(%arg0: i32, %arg1: i32) -> (i32, i32) {
    %c0_i32 = arith.constant 0 : i32
    %c0_i32_0 = arith.constant 0 : i32
    %c0_i32_1 = arith.constant 0 : i32
    return %c0_i32, %c0_i32_0 : i32, i32
  }
  func.func @transform_2(%arg0: i32, %arg1: i32) -> (i32, i32) {
    %c0_i32 = arith.constant 0 : i32
    %c0_i32_0 = arith.constant 0 : i32
    return %c0_i32, %arg0 : i32, i32
  }
  func.func @transform_3(%arg0: i32, %arg1: i32) -> (i32, i32) {
    %c0_i32 = arith.constant 0 : i32
    return %arg1, %arg0 : i32, i32
  }
}

</mosaic_0001>

<llo_original>
// kernel: tpu_custom_call.1
$region0: #{tpu_custom_call.1}
  #allocation0 [shape = 'u32[]', space=smem, size = 0x4, offset = 0x4, fixed_abs, tag = 'smem constant byte address 0x4 - core index']
  #allocation1 [shape = 'u32[144,128]{1,0:T(1,128)}', space=vmem, size = 0x12000, scoped, tag = 'internal scratch']
  %s0 = inlined_call_operand.hbm [shape: bf16[16,32], index: 0, kind: input, shape index: {}]
  %s1 = inlined_call_operand.hbm [shape: bf16[32,64], index: 1, kind: input, shape index: {}]
  %s2 = inlined_call_operand.hbm [shape: bf16[64,256], index: 2, kind: input, shape index: {}]
  %s3 = inlined_call_operand.hbm [shape: bf16[16,256], index: 3, kind: output, shape index: {}]
  %s4 = sld [smem:[#allocation0]]
  $region34: #{tpu_custom_call.1} parent=0
    _
  %s6 = ssub.s32 1, %s4
  %s7 = scalar_select 0, %s6, %s4
  $region1: #{tpu_custom_call.1} parent=0
    #allocation2 [shape = 'u8[4096]{0}', space=vmem, size = 0x1000, scoped, tag = 'input window, operand 0, single buffered']
    #allocation3 [shape = 's32[1]{0}', space=sflag, size = 0x4, scoped, tag = 'scoped memory for tpu_custom_call.1']
    #allocation4 [shape = 's32[1]{0}', space=sflag, size = 0x4, scoped, tag = 'scoped memory for tpu_custom_call.1']
    #allocation5 [shape = 'u8[8192]{0}', space=vmem, size = 0x2000, scoped, tag = 'input window, operand 1, single buffered']
    #allocation6 [shape = 's32[1]{0}', space=sflag, size = 0x4, scoped, tag = 'scoped memory for tpu_custom_call.1']
    #allocation7 [shape = 'u8[32768]{0}', space=vmem, size = 0x8000, scoped, tag = 'input window, operand 2, single buffered']
    #allocation8 [shape = 'u8[8192]{0}', space=vmem, size = 0x2000, scoped, tag = 'output window, operand 0, single buffered']
    %8 = vsyncpa [#allocation3], 0
    %9 = vsyncpa [#allocation6], 0
    %10 = vsyncpa [#allocation4], 0
    // Predicated region
    $region2: #{tpu_custom_call.1} parent=1 // pred_check
      _
    $region3: #{tpu_custom_call.1} parent=1 // pred_check_branch
      %12 = sbr.rel (0) target = $region5
    $region4: #{tpu_custom_call.1} parent=1 // pred_region
      %s14 = ssub.s32 128, 128
      %15 = vsyncadd [#allocation3], %s14
      %s16 = sshll.u32 [#allocation2], 4
      %s17 = int_to_ptr.vmem [resolvable:$true] %s16
      %22 = dma.hbm_to_vmem [thread:$0]  %s0, 128, %s17, [#allocation3], 64, 64, 4
    $region5: #{tpu_custom_call.1} parent=1 // pred_fallthru
      _
    // Predicated region
    $region6: #{tpu_custom_call.1} parent=1 // pred_check
      _
    $region7: #{tpu_custom_call.1} parent=1 // pred_check_branch
      %24 = sbr.rel (0) target = $region9
    $region8: #{tpu_custom_call.1} parent=1 // pred_region
      %s26 = ssub.s32 256, 256
      %27 = vsyncadd [#allocation6], %s26
      %s28 = sshll.u32 [#allocation5], 4
      %s29 = int_to_ptr.vmem [resolvable:$true] %s28
      %34 = dma.hbm_to_vmem [thread:$0]  %s1, 256, %s29, [#allocation6], 64, 64, 4
    $region9: #{tpu_custom_call.1} parent=1 // pred_fallthru
      _
    // Predicated region
    $region10: #{tpu_custom_call.1} parent=1 // pred_check
      _
    $region11: #{tpu_custom_call.1} parent=1 // pred_check_branch
      %36 = sbr.rel (0) target = $region13
    $region12: #{tpu_custom_call.1} parent=1 // pred_region
      %s38 = ssub.s32 1024, 1024
      %39 = vsyncadd [#allocation6], %s38
      %s40 = sshll.u32 [#allocation7], 4
      %s41 = int_to_ptr.vmem [resolvable:$true] %s40
      %46 = dma.hbm_to_vmem [thread:$0]  %s2, 1024, %s41, [#allocation6], 128, 128, 8
    $region13: #{tpu_custom_call.1} parent=1 // pred_fallthru
      _
    // Predicated region
    $region14: #{tpu_custom_call.1} parent=1 // pred_check
      _
    $region15: #{tpu_custom_call.1} parent=1 // pred_check_branch
      %48 = sbr.rel (0) target = $region17
    $region16: #{tpu_custom_call.1} parent=1 // pred_region
      %49 = dma.done [#allocation3], 128
    $region17: #{tpu_custom_call.1} parent=1 // pred_fallthru
      _
    // Predicated region
    $region18: #{tpu_custom_call.1} parent=1 // pred_check
      _
    $region19: #{tpu_custom_call.1} parent=1 // pred_check_branch
      %51 = sbr.rel (0) target = $region21
    $region20: #{tpu_custom_call.1} parent=1 // pred_region
      %52 = dma.done [#allocation6], 256
    $region21: #{tpu_custom_call.1} parent=1 // pred_fallthru
      _
    // Predicated region
    $region22: #{tpu_custom_call.1} parent=1 // pred_check
      _
    $region23: #{tpu_custom_call.1} parent=1 // pred_check_branch
      %54 = sbr.rel (0) target = $region25
    $region24: #{tpu_custom_call.1} parent=1 // pred_region
      %55 = dma.done [#allocation6], 1024
    $region25: #{tpu_custom_call.1} parent=1 // pred_fallthru
      _
    %v57 = vld [vmem:[#allocation2] sm:$0xf]
    %v58 = vld [vmem:[#allocation2 + $0x4] sm:$0xf]
    %v59 = vld [vmem:[#allocation5] sm:$0xf]
    %v60 = vld [vmem:[#allocation5 + $0x4] sm:$0xf]
    %v61 = vld [vmem:[#allocation5 + $0x8] sm:$0xf]
    %v62 = vld [vmem:[#allocation5 + $0xc] sm:$0xf]
    %v65 = vunpack.c.l.b16 %v57
    %v66 = vunpack.c.l.b16 %v58
    %v67 = vpack.c.b16 %v66, %v65
    %v72 = vunpack.c.l.b16 %v59
    %v73 = vunpack.c.l.b16 %v60
    %v74 = vunpack.c.l.b16 %v61
    %v75 = vunpack.c.l.b16 %v62
    %v76 = vpack.c.b16 %v73, %v72
    %v77 = vpack.c.b16 %v75, %v74
    %vm80 = vcmask 261120
    %v82 = vsel %vm80, %v67, 0
    %84 = vmatprep.subr.bf16.mxu0 0
    %85 = vmatpush1.bf16.msra.mxu0 %v76
    %86 = vmatprep.subr.bf16.mxu0 0
    %87 = vmatpush1.bf16.msra.mxu0 %v77
    %88 = vmatprep.subr.bf16.mxu0 0
    %89 = vmatpush1.bf16.msra.mxu0 0
    %90 = vmatprep.subr.bf16.mxu0 0
    %91 = vmatpush1.bf16.msra.mxu0 0
    %92 = vmatprep.subr.bf16.mxu0 0
    %93 = vmatpush1.bf16.msra.mxu0 0
    %94 = vmatprep.subr.bf16.mxu0 0
    %95 = vmatpush1.bf16.msra.mxu0 0
    %96 = vmatprep.subr.bf16.mxu0 0
    %97 = vmatpush1.bf16.msra.mxu0 0
    %98 = vmatprep.subr.bf16.mxu0 0
    %99 = vmatpush1.bf16.msra.mxu0 0
    %100 = vmatprep.subr.bf16.mxu0 0
    %101 = vmatpush1.bf16.msra.mxu0 0
    %102 = vmatprep.subr.bf16.mxu0 0
    %103 = vmatpush1.bf16.msra.mxu0 0
    %104 = vmatprep.subr.bf16.mxu0 0
    %105 = vmatpush1.bf16.msra.mxu0 0
    %106 = vmatprep.subr.bf16.mxu0 0
    %107 = vmatpush1.bf16.msra.mxu0 0
    %108 = vmatprep.subr.bf16.mxu0 0
    %109 = vmatpush1.bf16.msra.mxu0 0
    %110 = vmatprep.subr.bf16.mxu0 0
    %111 = vmatpush1.bf16.msra.mxu0 0
    %112 = vmatprep.subr.bf16.mxu0 0
    %113 = vmatpush1.bf16.msra.mxu0 0
    %114 = vmatprep.subr.bf16.mxu0 0
    %115 = vmatpush1.bf16.msra.mxu0 0
    %116 = vmatprep.mubr.bf16.mxu0 0
    %117 = vmatmul.mubr.bf16.gmra.mrb[0].mxu0 %v82
    %v118 = vpop.f32.mrb[0].mxu0
    %v119 = vadd.f32 0.0, %v118
    %v120 = vpop.f32.mrb[0].mxu0
    %v121 = vpop.f32.mrb[0].mxu0
    %v122 = vadd.f32 0.0, %v121
    %v123 = vpop.f32.mrb[0].mxu0
    %124 = vdwg.mxu0
    %v125 = vmul.f32 %v119, %v119
    %v126 = vmul.f32 %v122, %v122
    %vm127 = vcmask 523264
    %v128 = vsel %vm127, %v125, 0.0
    %129 = vadd.xlane.f32.xlu0 %v128
    %v130 = vpop.xlane.xlu0 %129
    %v131 = vsel %vm127, %v126, 0.0
    %132 = vadd.xlane.f32.xlu0 %v131
    %v133 = vpop.xlane.xlu0 %132
    %v134 = vmax.f32 %v130, 1e-24
    %v135 = vmax.f32 %v133, 1e-24
    %v136 = vrsqrt.pop %v134
    %v137 = vrsqrt.pop %v135
    %v138 = vmul.f32 %v119, %v136
    %v139 = vmul.f32 %v122, %v137
    %v140 = vpack.c.bf16 %v139, %v138
    %v141 = vld [vmem:[#allocation7] sm:$0xff]
    %v142 = vld [vmem:[#allocation7 + $0x8] sm:$0xff]
    %v143 = vld [vmem:[#allocation7 + $0x10] sm:$0xff]
    %v144 = vld [vmem:[#allocation7 + $0x18] sm:$0xff]
    %v145 = vld [vmem:[#allocation7 + $0x20] sm:$0xff]
    %v146 = vld [vmem:[#allocation7 + $0x28] sm:$0xff]
    %v147 = vld [vmem:[#allocation7 + $0x30] sm:$0xff]
    %v148 = vld [vmem:[#allocation7 + $0x38] sm:$0xff]
    %v157 = vunpack.c.l.b16 %v141
    %v158 = vunpack.c.h.b16 %v141
    %v159 = vunpack.c.l.b16 %v142
    %v160 = vunpack.c.h.b16 %v142
    %v161 = vunpack.c.l.b16 %v143
    %v162 = vunpack.c.h.b16 %v143
    %v163 = vunpack.c.l.b16 %v144
    %v164 = vunpack.c.h.b16 %v144
    %v165 = vunpack.c.l.b16 %v145
    %v166 = vunpack.c.h.b16 %v145
    %v167 = vunpack.c.l.b16 %v146
    %v168 = vunpack.c.h.b16 %v146
    %v169 = vunpack.c.l.b16 %v147
    %v170 = vunpack.c.h.b16 %v147
    %v171 = vunpack.c.l.b16 %v148
    %v172 = vunpack.c.h.b16 %v148
    %v173 = vpack.c.b16 %v159, %v157
    %v174 = vpack.c.b16 %v160, %v158
    %v175 = vpack.c.b16 %v163, %v161
    %v176 = vpack.c.b16 %v164, %v162
    %v177 = vpack.c.b16 %v167, %v165
    %v178 = vpack.c.b16 %v168, %v166
    %v179 = vpack.c.b16 %v171, %v169
    %v180 = vpack.c.b16 %v172, %v170
    %v190 = vsel %vm127, %v140, 0
    %192 = vmatprep.subr.bf16.mxu0 %v174
    %193 = vmatpush1.bf16.msra.mxu0 %v173
    %194 = vmatprep.subr.bf16.mxu0 %v176
    %195 = vmatpush1.bf16.msra.mxu0 %v175
    %196 = vmatprep.subr.bf16.mxu0 %v178
    %197 = vmatpush1.bf16.msra.mxu0 %v177
    %198 = vmatprep.subr.bf16.mxu0 %v180
    %199 = vmatpush1.bf16.msra.mxu0 %v179
    %200 = vmatprep.subr.bf16.mxu0 0
    %201 = vmatpush1.bf16.msra.mxu0 0
    %202 = vmatprep.subr.bf16.mxu0 0
    %203 = vmatpush1.bf16.msra.mxu0 0
    %204 = vmatprep.subr.bf16.mxu0 0
    %205 = vmatpush1.bf16.msra.mxu0 0
    %206 = vmatprep.subr.bf16.mxu0 0
    %207 = vmatpush1.bf16.msra.mxu0 0
    %208 = vmatprep.subr.bf16.mxu0 0
    %209 = vmatpush1.bf16.msra.mxu0 0
    %210 = vmatprep.subr.bf16.mxu0 0
    %211 = vmatpush1.bf16.msra.mxu0 0
    %212 = vmatprep.subr.bf16.mxu0 0
    %213 = vmatpush1.bf16.msra.mxu0 0
    %214 = vmatprep.subr.bf16.mxu0 0
    %215 = vmatpush1.bf16.msra.mxu0 0
    %216 = vmatprep.subr.bf16.mxu0 0
    %217 = vmatpush1.bf16.msra.mxu0 0
    %218 = vmatprep.subr.bf16.mxu0 0
    %219 = vmatpush1.bf16.msra.mxu0 0
    %220 = vmatprep.subr.bf16.mxu0 0
    %221 = vmatpush1.bf16.msra.mxu0 0
    %222 = vmatprep.subr.bf16.mxu0 0
    %223 = vmatpush1.bf16.msra.mxu0 0
    %224 = vmatprep.mubr.bf16.mxu0 0
    %225 = vmatmul.mubr.bf16.gmra.mrb[0].mxu0 %v190
    %v226 = vpop.f32.mrb[0].mxu0
    %v227 = vadd.f32 0.0, %v226
    %v228 = vpop.f32.mrb[0].mxu0
    %v229 = vadd.f32 0.0, %v228
    %v230 = vpop.f32.mrb[0].mxu0
    %v231 = vadd.f32 0.0, %v230
    %v232 = vpop.f32.mrb[0].mxu0
    %v233 = vadd.f32 0.0, %v232
    %234 = vdwg.mxu0
    %v235 = vpack.c.bf16 %v231, %v227
    %v236 = vpack.c.bf16 %v233, %v229
    %v239 = vunpack.c.l.b16 %v235
    %v240 = vunpack.c.l.b16 %v236
    %v241 = vunpack.c.h.b16 %v235
    %v242 = vunpack.c.h.b16 %v236
    %v243 = vpack.c.b16 %v240, %v239
    %v244 = vpack.c.b16 %v242, %v241
    %247 = vst [vmem:[#allocation8] sm:$0xff] %v243
    %248 = vst [vmem:[#allocation8 + $0x8] sm:$0xff] %v244
    // Predicated region
    $region26: #{tpu_custom_call.1} parent=1 // pred_check
      _
    $region27: #{tpu_custom_call.1} parent=1 // pred_check_branch
      %250 = sbr.rel (0) target = $region29
    $region28: #{tpu_custom_call.1} parent=1 // pred_region
      %s252 = ssub.s32 256, 256
      %253 = vsyncadd [#allocation4], %s252
      %s254 = sshll.u32 [#allocation8], 4
      %s255 = int_to_ptr.vmem [resolvable:$true] %s254
      %260 = dma.vmem_to_hbm [thread:$0]  %s255, 256, %s3, [#allocation4], 128, 128, 8
    $region29: #{tpu_custom_call.1} parent=1 // pred_fallthru
      _
    // Predicated region
    $region30: #{tpu_custom_call.1} parent=1 // pred_check
      _
    $region31: #{tpu_custom_call.1} parent=1 // pred_check_branch
      %262 = sbr.rel (0) target = $region33
    $region32: #{tpu_custom_call.1} parent=1 // pred_region
      %263 = dma.done [#allocation4], 256
    $region33: #{tpu_custom_call.1} parent=1 // pred_fallthru
      _
    %264 = vsyncpa [#allocation3], 1
    %265 = vsyncpa [#allocation6], 1
    %266 = vsyncpa [#allocation4], 1

</llo_original>
